<compile_context>
chip_gen: v5e
topology: v5e:2x2
jax: 0.10.0
libtpu: 0.0.40
codegen_flags: <defaults>
</compile_context>

<pallas_src>
import jax
import jax.numpy as jnp
from jax.experimental import pallas as pl
from jax.experimental.pallas import tpu as pltpu


def _round_up(n, m):
    return ((n + m - 1) // m) * m


def mlp_logsoftmax_kernel(x_ref, w1_ref, b1_ref, w3_ref, b3_ref,
                          w5_ref, b5_ref, o_ref):
    # x tile (TM, F): cast to bf16 for the MXU, accumulate in f32.
    x = x_ref[...].astype(jnp.bfloat16)

    # fc1 + ReLU  (bias/ReLU on the VPU in f32)
    h1 = jnp.dot(x, w1_ref[...], preferred_element_type=jnp.float32)
    h1 = jnp.maximum(h1 + b1_ref[...], 0.0)                       # (TM, 64)

    # fc3 + ReLU
    h3 = jnp.dot(h1.astype(jnp.bfloat16), w3_ref[...],
                 preferred_element_type=jnp.float32)
    h3 = jnp.maximum(h3 + b3_ref[...], 0.0)                       # (TM, 16)

    # dropout(p=0.25) is identity in eval/inference mode.
    # TODO(synk): training-mode dropout (stateful PRNG mask) not implemented.

    # fc5
    logits = jnp.dot(h3.astype(jnp.bfloat16), w5_ref[...],
                     preferred_element_type=jnp.float32)
    logits = logits + b5_ref[...]                                 # (TM, C)

    # log_softmax over the class axis (last axis), max-shifted for stability.
    # max / sum are XLU cross-lane reduces; exp / log go to the EUP.
    m = jnp.max(logits, axis=1, keepdims=True)
    shifted = logits - m
    lse = jnp.log(jnp.sum(jnp.exp(shifted), axis=1, keepdims=True))
    o_ref[...] = (shifted - lse).astype(o_ref.dtype)


def custom_image_model_multiclass(x, params, *, tm=4096):
    """x: (batch, feature_size) float32. Returns log-probs (batch, num_classes)."""
    w1, b1, w3, b3, w5, b5 = params
    assert tm % 8 == 0, "batch tile must be a multiple of 8 sublanes"

    B, F = x.shape
    C = w5.shape[1]

    # Weights feed the MXU in bf16 (biases stay f32 for the VPU path).
    w1 = w1.astype(jnp.bfloat16)
    w3 = w3.astype(jnp.bfloat16)
    w5 = w5.astype(jnp.bfloat16)

    # Pick the effective batch tile and pad the batch to a whole number of tiles.
    tm_eff = min(tm, _round_up(B, 8))
    b_pad = _round_up(B, tm_eff)
    if b_pad != B:
        x = jnp.pad(x, ((0, b_pad - B), (0, 0)))
    grid = (b_pad // tm_eff,)

    vmem = pltpu.MemorySpace.VMEM
    # Streamed operands: tiled along batch, pipelined / double-buffered.
    x_spec = pl.BlockSpec((tm_eff, F), lambda i: (i, 0), memory_space=vmem)
    out_spec = pl.BlockSpec((tm_eff, C), lambda i: (i, 0), memory_space=vmem)
    # Resident operands: full-array blocks, constant index_map -> DMA'd once.
    resident = lambda a: pl.BlockSpec(a.shape, lambda i: (0, 0),
                                      memory_space=vmem)

    flops = 2 * b_pad * (F * 64 + 64 * 16 + 16 * C)
    bytes_accessed = (b_pad * F * 4 + b_pad * C * 4              # x in, out
                      + (F * 64 + 64 * 16 + 16 * C) * 2          # bf16 weights
                      + (64 + 16 + C) * 4)                       # f32 biases

    out = pl.pallas_call(
        mlp_logsoftmax_kernel,
        out_shape=jax.ShapeDtypeStruct((b_pad, C), jnp.float32),
        grid_spec=pltpu.PrefetchScalarGridSpec(
            num_scalar_prefetch=0,
            grid=grid,
            in_specs=[x_spec,
                      resident(w1), resident(b1),
                      resident(w3), resident(b3),
                      resident(w5), resident(b5)],
            out_specs=out_spec,
        ),
        compiler_params=pltpu.CompilerParams(
            dimension_semantics=("parallel",),      # megacore on v7x
            vmem_limit_bytes=64 * 1024 * 1024,      # budget against v7x VMEM
        ),
        cost_estimate=pl.CostEstimate(
            flops=flops,
            transcendentals=b_pad * (C + 1),
            bytes_accessed=bytes_accessed,
        ),
    )(x, w1, b1, w3, b3, w5, b5)

    return out[:B] if b_pad != B else out


def reference(x, params):
    """Pure-JAX f32 reference of the PyTorch forward (dropout = identity)."""
    w1, b1, w3, b3, w5, b5 = params
    h = jnp.maximum(x @ w1 + b1, 0.0)
    h = jnp.maximum(h @ w3 + b3, 0.0)
    logits = h @ w5 + b5
    return jax.nn.log_softmax(logits, axis=1)


def init_params(key, feature_size, num_classes):
    """Deterministic init matching nn.Linear shapes (stored transposed: (in, out))."""
    k1, k2, k3, k4, k5, k6 = jax.random.split(key, 6)

    def lin(kw, kb, fan_in, fan_out):
        bound = 1.0 / jnp.sqrt(float(fan_in))
        w = jax.random.uniform(kw, (fan_in, fan_out), jnp.float32, -bound, bound)
        b = jax.random.uniform(kb, (1, fan_out), jnp.float32, -bound, bound)
        return w, b

    w1, b1 = lin(k1, k2, feature_size, 64)   # fc1
    w3, b3 = lin(k3, k4, 64, 16)             # fc3
    w5, b5 = lin(k5, k6, 16, num_classes)    # fc5
    return (w1, b1, w3, b3, w5, b5)


if __name__ == "__main__":
    feature_size = 32
    num_classes = 10

    key = jax.random.PRNGKey(0)
    kx, kp, kx2 = jax.random.split(key, 3)
    params = init_params(kp, feature_size, num_classes)

    # Small, single-tile case.
    batch = 8
    x = jax.random.normal(kx, (batch, feature_size), dtype=jnp.float32)
    out = jax.block_until_ready(custom_image_model_multiclass(x, params))
    assert out.shape == (batch, num_classes)
    assert jnp.allclose(jnp.sum(jnp.exp(out), axis=1), 1.0, atol=1e-5)
    assert jnp.allclose(out, reference(x, params), atol=5e-2, rtol=5e-2)

    # Multi-tile case (exercises the batch grid + pad/slice path), still small.
    batch2 = 300
    x2 = jax.random.normal(kx2, (batch2, feature_size), dtype=jnp.float32)
    out2 = jax.block_until_ready(
        custom_image_model_multiclass(x2, params, tm=128))
    assert out2.shape == (batch2, num_classes)
    assert jnp.allclose(jnp.sum(jnp.exp(out2), axis=1), 1.0, atol=1e-5)
    assert jnp.allclose(out2, reference(x2, params), atol=5e-2, rtol=5e-2)

    print("KERNEL_OK")
</pallas_src>

<mosaic_0001>
module attributes {stable_mosaic.version = 11 : i64} {
  func.func @mlp_logsoftmax_kernel(%arg0: i32, %arg1: memref<8x32xf32, #tpu.memory_space<vmem>>, %arg2: memref<32x64xbf16, #tpu.memory_space<vmem>>, %arg3: memref<1x64xf32, #tpu.memory_space<vmem>>, %arg4: memref<64x16xbf16, #tpu.memory_space<vmem>>, %arg5: memref<1x16xf32, #tpu.memory_space<vmem>>, %arg6: memref<16x10xbf16, #tpu.memory_space<vmem>>, %arg7: memref<1x10xf32, #tpu.memory_space<vmem>>, %arg8: memref<8x10xf32, #tpu.memory_space<vmem>>) attributes {dimension_semantics = [#tpu.dimension_semantics<parallel>], iteration_bounds = array<i64: 1>, scalar_prefetch = 0 : i64, scratch_operands = 0 : i64, tpu.core_type = #tpu.core_type<tc>, window_params = [{transform_indices = @transform_0, window_bounds = array<i64: 8, 32>}, {pipeline_mode = #tpu.pipeline_mode<synchronous>, transform_indices = @transform_1, window_bounds = array<i64: 32, 64>}, {pipeline_mode = #tpu.pipeline_mode<synchronous>, transform_indices = @transform_2, window_bounds = array<i64: 1, 64>}, {pipeline_mode = #tpu.pipeline_mode<synchronous>, transform_indices = @transform_3, window_bounds = array<i64: 64, 16>}, {pipeline_mode = #tpu.pipeline_mode<synchronous>, transform_indices = @transform_4, window_bounds = array<i64: 1, 16>}, {pipeline_mode = #tpu.pipeline_mode<synchronous>, transform_indices = @transform_5, window_bounds = array<i64: 16, 10>}, {pipeline_mode = #tpu.pipeline_mode<synchronous>, transform_indices = @transform_6, window_bounds = array<i64: 1, 10>}, {transform_indices = @transform_7, window_bounds = array<i64: 8, 10>}]} {
    %c0 = arith.constant 0 : index
    %c0_0 = arith.constant 0 : index
    %0 = vector.load %arg1[%c0, %c0_0] : memref<8x32xf32, #tpu.memory_space<vmem>>, vector<8x32xf32>
    %1 = arith.truncf %0 : vector<8x32xf32> to vector<8x32xbf16>
    %c0_1 = arith.constant 0 : index
    %c0_2 = arith.constant 0 : index
    %2 = vector.load %arg2[%c0_1, %c0_2] : memref<32x64xbf16, #tpu.memory_space<vmem>>, vector<32x64xbf16>
    %cst = arith.constant dense<0.000000e+00> : vector<8x64xf32>
    %3 = tpu.matmul %1, %2, %cst {dimension_numbers = #tpu.dot_dimension_numbers<[1], [0], [0], [1], [0, 0, 1, 1], [], []>} : vector<8x32xbf16>, vector<32x64xbf16>, vector<8x64xf32> -> vector<8x64xf32>
    %c0_3 = arith.constant 0 : index
    %c0_4 = arith.constant 0 : index
    %4 = vector.load %arg3[%c0_3, %c0_4] : memref<1x64xf32, #tpu.memory_space<vmem>>, vector<1x64xf32>
    %5 = vector.broadcast %4 : vector<1x64xf32> to vector<8x64xf32>
    %6 = arith.addf %3, %5 : vector<8x64xf32>
    %cst_5 = arith.constant 0.000000e+00 : f32
    %7 = vector.broadcast %cst_5 : f32 to vector<8x64xf32>
    %8 = arith.maximumf %6, %7 : vector<8x64xf32>
    %9 = arith.truncf %8 : vector<8x64xf32> to vector<8x64xbf16>
    %c0_6 = arith.constant 0 : index
    %c0_7 = arith.constant 0 : index
    %10 = vector.load %arg4[%c0_6, %c0_7] : memref<64x16xbf16, #tpu.memory_space<vmem>>, vector<64x16xbf16>
    %cst_8 = arith.constant dense<0.000000e+00> : vector<8x16xf32>
    %11 = tpu.matmul %9, %10, %cst_8 {dimension_numbers = #tpu.dot_dimension_numbers<[1], [0], [0], [1], [0, 0, 1, 1], [], []>} : vector<8x64xbf16>, vector<64x16xbf16>, vector<8x16xf32> -> vector<8x16xf32>
    %c0_9 = arith.constant 0 : index
    %c0_10 = arith.constant 0 : index
    %12 = vector.load %arg5[%c0_9, %c0_10] : memref<1x16xf32, #tpu.memory_space<vmem>>, vector<1x16xf32>
    %13 = vector.broadcast %12 : vector<1x16xf32> to vector<8x16xf32>
    %14 = arith.addf %11, %13 : vector<8x16xf32>
    %cst_11 = arith.constant 0.000000e+00 : f32
    %15 = vector.broadcast %cst_11 : f32 to vector<8x16xf32>
    %16 = arith.maximumf %14, %15 : vector<8x16xf32>
    %17 = arith.truncf %16 : vector<8x16xf32> to vector<8x16xbf16>
    %c0_12 = arith.constant 0 : index
    %c0_13 = arith.constant 0 : index
    %18 = vector.load %arg6[%c0_12, %c0_13] : memref<16x10xbf16, #tpu.memory_space<vmem>>, vector<16x10xbf16>
    %cst_14 = arith.constant dense<0.000000e+00> : vector<8x10xf32>
    %19 = tpu.matmul %17, %18, %cst_14 {dimension_numbers = #tpu.dot_dimension_numbers<[1], [0], [0], [1], [0, 0, 1, 1], [], []>} : vector<8x16xbf16>, vector<16x10xbf16>, vector<8x10xf32> -> vector<8x10xf32>
    %c0_15 = arith.constant 0 : index
    %c0_16 = arith.constant 0 : index
    %20 = vector.load %arg7[%c0_15, %c0_16] : memref<1x10xf32, #tpu.memory_space<vmem>>, vector<1x10xf32>
    %21 = vector.broadcast %20 : vector<1x10xf32> to vector<8x10xf32>
    %22 = arith.addf %19, %21 : vector<8x10xf32>
    %cst_17 = arith.constant dense<0xFF800000> : vector<8xf32>
    %23 = vector.multi_reduction <maximumf>, %22, %cst_17 [1] : vector<8x10xf32> to vector<8xf32>
    %24 = vector.shape_cast %23 : vector<8xf32> to vector<8x1xf32>
    %25 = vector.broadcast %24 : vector<8x1xf32> to vector<8x10xf32>
    %26 = arith.subf %22, %25 : vector<8x10xf32>
    %27 = math.exp %26 : vector<8x10xf32>
    %cst_18 = arith.constant dense<0.000000e+00> : vector<8xf32>
    %28 = vector.multi_reduction <add>, %27, %cst_18 [1] : vector<8x10xf32> to vector<8xf32>
    %29 = vector.shape_cast %28 : vector<8xf32> to vector<8x1xf32>
    %30 = math.log %29 : vector<8x1xf32>
    %31 = vector.broadcast %30 : vector<8x1xf32> to vector<8x10xf32>
    %32 = arith.subf %26, %31 : vector<8x10xf32>
    %c0_19 = arith.constant 0 : index
    %c0_20 = arith.constant 0 : index
    %33 = vector.load %arg8[%c0_19, %c0_20] : memref<8x10xf32, #tpu.memory_space<vmem>>, vector<8x10xf32>
    tpu.vector_store %arg8[%c0_19, %c0_20], %32 {strides = array<i32>} : memref<8x10xf32, #tpu.memory_space<vmem>>, vector<8x10xf32>,
    return
  }
  func.func @transform_0(%arg0: i32) -> (i32, i32) {
    %c0_i32 = arith.constant 0 : i32
    %c0_i32_0 = arith.constant 0 : i32
    return %arg0, %c0_i32 : i32, i32
  }
  func.func @transform_1(%arg0: i32) -> (i32, i32) {
    %c0_i32 = arith.constant 0 : i32
    %c0_i32_0 = arith.constant 0 : i32
    %c0_i32_1 = arith.constant 0 : i32
    return %c0_i32, %c0_i32_0 : i32, i32
  }
  func.func @transform_2(%arg0: i32) -> (i32, i32) {
    %c0_i32 = arith.constant 0 : i32
    %c0_i32_0 = arith.constant 0 : i32
    %c0_i32_1 = arith.constant 0 : i32
    return %c0_i32, %c0_i32_0 : i32, i32
  }
  func.func @transform_3(%arg0: i32) -> (i32, i32) {
    %c0_i32 = arith.constant 0 : i32
    %c0_i32_0 = arith.constant 0 : i32
    %c0_i32_1 = arith.constant 0 : i32
    return %c0_i32, %c0_i32_0 : i32, i32
  }
  func.func @transform_4(%arg0: i32) -> (i32, i32) {
    %c0_i32 = arith.constant 0 : i32
    %c0_i32_0 = arith.constant 0 : i32
    %c0_i32_1 = arith.constant 0 : i32
    return %c0_i32, %c0_i32_0 : i32, i32
  }
  func.func @transform_5(%arg0: i32) -> (i32, i32) {
    %c0_i32 = arith.constant 0 : i32
    %c0_i32_0 = arith.constant 0 : i32
    %c0_i32_1 = arith.constant 0 : i32
    return %c0_i32, %c0_i32_0 : i32, i32
  }
  func.func @transform_6(%arg0: i32) -> (i32, i32) {
    %c0_i32 = arith.constant 0 : i32
    %c0_i32_0 = arith.constant 0 : i32
    %c0_i32_1 = arith.constant 0 : i32
    return %c0_i32, %c0_i32_0 : i32, i32
  }
  func.func @transform_7(%arg0: i32) -> (i32, i32) {
    %c0_i32 = arith.constant 0 : i32
    %c0_i32_0 = arith.constant 0 : i32
    return %arg0, %c0_i32 : i32, i32
  }
}

</mosaic_0001>

<llo_original>
// kernel: tpu_custom_call.1
$region0: #{tpu_custom_call.1}
  #allocation0 [shape = 'u32[]', space=smem, size = 0x4, offset = 0x4, fixed_abs, tag = 'smem constant byte address 0x4 - core index']
  #allocation1 [shape = 'u32[72,128]{1,0:T(1,128)}', space=vmem, size = 0x9000, scoped, tag = 'internal scratch']
  %s0 = inlined_call_operand.vmem [shape: f32[8,32], index: 0, kind: input, shape index: {}]
  %s1 = inlined_call_operand.vmem [shape: bf16[32,64], index: 1, kind: input, shape index: {}]
  %s2 = inlined_call_operand.vmem [shape: f32[1,64], index: 2, kind: input, shape index: {}]
  %s3 = inlined_call_operand.vmem [shape: bf16[64,16], index: 3, kind: input, shape index: {}]
  %s4 = inlined_call_operand.vmem [shape: f32[1,16], index: 4, kind: input, shape index: {}]
  %s5 = inlined_call_operand.vmem [shape: bf16[16,10], index: 5, kind: input, shape index: {}]
  %s6 = inlined_call_operand.vmem [shape: f32[1,10], index: 6, kind: input, shape index: {}]
  %s7 = inlined_call_operand.hbm [shape: f32[8,10], index: 7, kind: output, shape index: {}]
  %s8 = sld [smem:[#allocation0]]
  $region38: #{tpu_custom_call.1} parent=0
    _
  %s10 = ssub.s32 1, %s8
  %s11 = scalar_select 0, %s10, %s8
  $region1: #{tpu_custom_call.1} parent=0
    #allocation2 [shape = 'u8[4096]{0}', space=vmem, size = 0x1000, scoped, tag = 'output window, operand 0, single buffered']
    #allocation3 [shape = 's32[1]{0}', space=sflag, size = 0x4, scoped, tag = 'scoped memory for tpu_custom_call.1']
    %12 = vsyncpa [#allocation3], 0
    // Predicated region
    $region2: #{tpu_custom_call.1} parent=1 // pred_check
      _
    $region3: #{tpu_custom_call.1} parent=1 // pred_check_branch
      %14 = sbr.rel (0) target = $region5
    $region4: #{tpu_custom_call.1} parent=1 // pred_region
      _
    $region5: #{tpu_custom_call.1} parent=1 // pred_fallthru
      _
    // Predicated region
    $region6: #{tpu_custom_call.1} parent=1 // pred_check
      _
    $region7: #{tpu_custom_call.1} parent=1 // pred_check_branch
      %16 = sbr.rel (0) target = $region9
    $region8: #{tpu_custom_call.1} parent=1 // pred_region
      _
    $region9: #{tpu_custom_call.1} parent=1 // pred_fallthru
      _
    // Predicated region
    $region10: #{tpu_custom_call.1} parent=1 // pred_check
      _
    $region11: #{tpu_custom_call.1} parent=1 // pred_check_branch
      %18 = sbr.rel (0) target = $region13
    $region12: #{tpu_custom_call.1} parent=1 // pred_region
      _
    $region13: #{tpu_custom_call.1} parent=1 // pred_fallthru
      _
    // Predicated region
    $region14: #{tpu_custom_call.1} parent=1 // pred_check
      _
    $region15: #{tpu_custom_call.1} parent=1 // pred_check_branch
      %20 = sbr.rel (0) target = $region17
    $region16: #{tpu_custom_call.1} parent=1 // pred_region
      _
    $region17: #{tpu_custom_call.1} parent=1 // pred_fallthru
      _
    // Predicated region
    $region18: #{tpu_custom_call.1} parent=1 // pred_check
      _
    $region19: #{tpu_custom_call.1} parent=1 // pred_check_branch
      %22 = sbr.rel (0) target = $region21
    $region20: #{tpu_custom_call.1} parent=1 // pred_region
      _
    $region21: #{tpu_custom_call.1} parent=1 // pred_fallthru
      _
    // Predicated region
    $region22: #{tpu_custom_call.1} parent=1 // pred_check
      _
    $region23: #{tpu_custom_call.1} parent=1 // pred_check_branch
      %24 = sbr.rel (0) target = $region25
    $region24: #{tpu_custom_call.1} parent=1 // pred_region
      _
    $region25: #{tpu_custom_call.1} parent=1 // pred_fallthru
      _
    // Predicated region
    $region26: #{tpu_custom_call.1} parent=1 // pred_check
      _
    $region27: #{tpu_custom_call.1} parent=1 // pred_check_branch
      %26 = sbr.rel (0) target = $region29
    $region28: #{tpu_custom_call.1} parent=1 // pred_region
      _
    $region29: #{tpu_custom_call.1} parent=1 // pred_fallthru
      _
    %v28 = vld [vmem:[%s0] sm:$0xff]
    %v29 = vpack.c.bf16 %v28, %v28
    %v30 = vld [vmem:[%s1] sm:$0xf]
    %v31 = vld [vmem:[%s1 + $0x4] sm:$0xf]
    %v32 = vld [vmem:[%s1 + $0x8] sm:$0xf]
    %v33 = vld [vmem:[%s1 + $0xc] sm:$0xf]
    %v34 = vld [vmem:[%s2] sm:$0x1]
    %v36 = vperm.slane %v34, 0
    %v42 = vunpack.c.l.b16 %v30
    %v43 = vunpack.c.l.b16 %v31
    %v44 = vunpack.c.l.b16 %v32
    %v45 = vunpack.c.l.b16 %v33
    %v46 = vpack.c.b16 %v43, %v42
    %v47 = vpack.c.b16 %v45, %v44
    %vm50 = vcmask 261120
    %v52 = vsel %vm50, %v29, 0
    %54 = vmatpush.bf16.msra.mxu0 0
    %55 = vmatpush.bf16.msra.mxu0 0
    %56 = vmatpush.bf16.msra.mxu0 0
    %57 = vmatpush.bf16.msra.mxu0 0
    %58 = vmatpush.bf16.msra.mxu0 0
    %59 = vmatpush.bf16.msra.mxu0 0
    %60 = vmatpush.bf16.msra.mxu0 %v47
    %61 = vmatpush.bf16.msra.mxu0 %v46
    %62 = vmatmul.bf16.gmra.mxu0 %v52
    %v63 = vpop.f32.mrf.mxu0
    %v64 = vadd.f32 %v36, %v63
    %v65 = vpop.f32.mrf.mxu0
    %66 = vdwg.mxu0
    %v67 = vmax.f32 %v64, 0.0
    %v68 = vpack.c.bf16 %v67, %v67
    %v69 = vld [vmem:[%s3] sm:$0xf]
    %v70 = vld [vmem:[%s3 + $0x4] sm:$0xf]
    %v71 = vld [vmem:[%s3 + $0x8] sm:$0xf]
    %v72 = vld [vmem:[%s3 + $0xc] sm:$0xf]
    %v73 = vld [vmem:[%s3 + $0x10] sm:$0xf]
    %v74 = vld [vmem:[%s3 + $0x14] sm:$0xf]
    %v75 = vld [vmem:[%s3 + $0x18] sm:$0xf]
    %v76 = vld [vmem:[%s3 + $0x1c] sm:$0xf]
    %v77 = vld [vmem:[%s4] sm:$0x1]
    %v79 = vperm.slane %v77, 0
    %v89 = vunpack.c.l.b16 %v69
    %v90 = vunpack.c.l.b16 %v70
    %v91 = vunpack.c.l.b16 %v71
    %v92 = vunpack.c.l.b16 %v72
    %v93 = vunpack.c.l.b16 %v73
    %v94 = vunpack.c.l.b16 %v74
    %v95 = vunpack.c.l.b16 %v75
    %v96 = vunpack.c.l.b16 %v76
    %v97 = vpack.c.b16 %v90, %v89
    %v98 = vpack.c.b16 %v92, %v91
    %v99 = vpack.c.b16 %v94, %v93
    %v100 = vpack.c.b16 %v96, %v95
    %vm105 = vcmask 523264
    %v107 = vsel %vm105, %v68, 0
    %109 = vmatpush.bf16.msra.mxu0 0
    %110 = vmatpush.bf16.msra.mxu0 0
    %111 = vmatpush.bf16.msra.mxu0 0
    %112 = vmatpush.bf16.msra.mxu0 0
    %113 = vmatpush.bf16.msra.mxu0 %v100
    %114 = vmatpush.bf16.msra.mxu0 %v99
    %115 = vmatpush.bf16.msra.mxu0 %v98
    %116 = vmatpush.bf16.msra.mxu0 %v97
    %117 = vmatmul.bf16.gmra.mxu0 %v107
    %v118 = vpop.f32.mrf.mxu0
    %v119 = vadd.f32 %v79, %v118
    %v120 = vpop.f32.mrf.mxu0
    %121 = vdwg.mxu0
    %v122 = vmax.f32 %v119, 0.0
    %v123 = vpack.c.bf16 %v122, %v122
    %v124 = vld [vmem:[%s5] sm:$0xf]
    %v125 = vld [vmem:[%s5 + $0x4] sm:$0xf]
    %v126 = vld [vmem:[%s6] sm:$0x1]
    %v128 = vperm.slane %v126, 0
    %v132 = vunpack.c.l.b16 %v124
    %v133 = vunpack.c.l.b16 %v125
    %v134 = vpack.c.b16 %v133, %v132
    %vm136 = vcmask 130048
    %v138 = vsel %vm136, %v123, 0
    %140 = vmatpush.bf16.msra.mxu0 0
    %141 = vmatpush.bf16.msra.mxu0 0
    %142 = vmatpush.bf16.msra.mxu0 0
    %143 = vmatpush.bf16.msra.mxu0 0
    %144 = vmatpush.bf16.msra.mxu0 0
    %145 = vmatpush.bf16.msra.mxu0 0
    %146 = vmatpush.bf16.msra.mxu0 0
    %147 = vmatpush.bf16.msra.mxu0 %v134
    %148 = vmatmul.bf16.gmra.mxu0 %v138
    %v149 = vpop.f32.mrf.mxu0
    %v150 = vadd.f32 %v128, %v149
    %v151 = vpop.f32.mrf.mxu0
    %152 = vdwg.mxu0
    %vm153 = vcmask 80896
    %v154 = vsel %vm153, %v150, -inf
    %155 = vmax.xlane.f32.xlu0 %v154
    %v156 = vpop.xlane.xlu0 %155
    %v157 = vsub.f32 %v150, %v156
    %v158 = vmul.f32 %v157, 1.442695
    %v159 = vpow.pop %v158
    %v160 = vsel %vm153, %v159, 0.0
    %161 = vadd.xlane.f32.xlu0 %v160
    %v162 = vpop.xlane.xlu0 %161
    %v163 = vlog2.pop %v162
    %v164 = vmul.f32 %v163, 0.6931472
    %v165 = vsub.f32 %v157, %v164
    %166 = vst.msk [vmem:[#allocation2] sm:$0xff] %vm153, %v165
    // Predicated region
    $region30: #{tpu_custom_call.1} parent=1 // pred_check
      _
    $region31: #{tpu_custom_call.1} parent=1 // pred_check_branch
      %168 = sbr.rel (0) target = $region33
    $region32: #{tpu_custom_call.1} parent=1 // pred_region
      %170 = vsyncadd [#allocation3], 0
      %s172 = sshll.u32 [#allocation2], 4
      %s173 = int_to_ptr.vmem [resolvable:$true] %s172
      %s174 = sshll.u32 %s7, 4
      %s175 = int_to_ptr.hbm [resolvable:$true] %s174
      %177 = dma.vmem_to_hbm [thread:$0]  %s173, 128, %s175, [#allocation3]
    $region33: #{tpu_custom_call.1} parent=1 // pred_fallthru
      _
    // Predicated region
    $region34: #{tpu_custom_call.1} parent=1 // pred_check
      _
    $region35: #{tpu_custom_call.1} parent=1 // pred_check_branch
      %179 = sbr.rel (0) target = $region37
    $region36: #{tpu_custom_call.1} parent=1 // pred_region
      %181 = dma.done [#allocation3], 128
    $region37: #{tpu_custom_call.1} parent=1 // pred_fallthru
      _
    %182 = vsyncpa [#allocation3], 1

</llo_original>
